<compile_context>
chip_gen: v7x
topology: tpu7x:2x2x1
jax: 0.10.0
libtpu: 0.0.40
codegen_flags: <defaults>
</compile_context>

<pallas_src>
import functools

import numpy as np
import jax
import jax.numpy as jnp
from jax import lax
from jax.experimental import pallas as pl
from jax.experimental.pallas import tpu as pltpu


def _round_up(x: int, m: int) -> int:
    return ((x + m - 1) // m) * m


def _fourier_topk_kernel(k, f_real, f_pad, x_ref, fwd_ref, inv_ref, o_ref, spec_ref):
    # x_ref:    (S, Nt)        time on sublanes, batch*channel on lanes
    # fwd_ref:  (2*f_pad, S)   stacked [cos; -sin] forward rDFT matrix
    # inv_ref:  (S, 2*f_pad)   stacked [icos | isin] inverse rDFT matrix
    # o_ref:    (S, Nt)
    # spec_ref: (2*f_pad, Nt)  VMEM scratch holding stacked [re; im]
    x = x_ref[...]

    # Forward rDFT: one MXU matmul producing stacked [re; im].
    spec_ref[...] = jnp.dot(fwd_ref[...], x, preferred_element_type=jnp.float32)

    re = spec_ref[pl.ds(0, f_pad), :]
    im = spec_ref[pl.ds(f_pad, f_pad), :]
    # |.|^2 has the same ordering as |.|; avoids a sqrt (keeps EUP free).
    mag = re * re + im * im

    row = lax.broadcasted_iota(jnp.int32, mag.shape, 0)
    big = jnp.int32(f_pad + 1)
    neg_inf = jnp.float32(-jnp.inf)

    # Padded frequency rows must never win the top-k selection.
    work0 = jnp.where(row < f_real, mag, neg_inf)
    mask0 = jnp.zeros_like(mag)

    def body(_, carry):
        mask, work = carry
        m = jnp.max(work, axis=0, keepdims=True)              # XLU sublane reduce
        cand = jnp.where(work == m, row, big)
        chosen = jnp.min(cand, axis=0, keepdims=True)         # tie-break: lowest freq
        sel = row == chosen
        mask = jnp.where(sel, jnp.float32(1.0), mask)
        work = jnp.where(sel, neg_inf, work)
        return mask, work

    # k is a small static Python int -> fully unroll for LLO scheduling.
    mask, _ = lax.fori_loop(0, k, body, (mask0, work0), unroll=True)

    # Write masked spectrum back into scratch (no concatenate materialization),
    # then one inverse-rDFT MXU matmul on the stacked buffer.
    spec_ref[pl.ds(0, f_pad), :] = re * mask
    spec_ref[pl.ds(f_pad, f_pad), :] = im * mask

    rec = jnp.dot(inv_ref[...], spec_ref[...], preferred_element_type=jnp.float32)
    o_ref[...] = rec.astype(o_ref.dtype)


def _dft_matrices(S: int, F: int, f_pad: int):
    """Host-side (constant-folded) stacked forward / inverse real-DFT matrices."""
    t = np.arange(S, dtype=np.float64)
    f = np.arange(f_pad, dtype=np.float64)
    ang = 2.0 * np.pi * np.outer(f, t) / S                     # (f_pad, S)
    valid = (np.arange(f_pad) < F).astype(np.float64)[:, None]
    fwd = np.concatenate([np.cos(ang) * valid, -np.sin(ang) * valid], axis=0)

    # Inverse rDFT Hermitian weights: w0 = 1, middle = 2, Nyquist = 1 (even S),
    # zero for padded rows.
    idx = np.arange(f_pad)
    w = np.where(idx == 0, 1.0, 2.0)
    if S % 2 == 0:
        w = np.where(idx == F - 1, 1.0, w)
    w = np.where(idx < F, w, 0.0)
    icos = (w[None, :] / S) * np.cos(ang).T                    # (S, f_pad)
    isin = -(w[None, :] / S) * np.sin(ang).T
    inv = np.concatenate([icos, isin], axis=1)                 # (S, 2*f_pad)
    return jnp.asarray(fwd, jnp.float32), jnp.asarray(inv, jnp.float32)


def fourier_approximate(timeseries: jax.Array, k: int) -> jax.Array:
    """Pallas equivalent of PatchTSTFourierApproximator.forward."""
    B, S, C = timeseries.shape
    N = B * C
    F = S // 2 + 1
    # Reference (argsort[-k:]) selects all F modes when k >= F.
    k = int(min(int(k), F))
    f_pad = _round_up(F, 8)

    fwd, inv = _dft_matrices(S, F, f_pad)

    # ---- lane-dense layout: time on sublanes, batch*channel on lanes ----
    x2 = jnp.transpose(timeseries, (1, 0, 2)).reshape(S, N).astype(jnp.float32)

    LANE = 128
    n_round = _round_up(N, LANE)
    # Largest lane tile (multiple of 128, up to 512) within a ~24 MiB VMEM budget.
    fixed = 4 * (2 * 2 * (2 * f_pad) * S)                      # fwd+inv, double-buffered
    per_col = 4 * (2 * 2 * S + 2 * S + 10 * f_pad)             # in/out (2x buf) + temps
    budget = 24 * 1024 * 1024
    tile_n = min(n_round, 512)
    while tile_n > LANE and fixed + per_col * tile_n > budget:
        tile_n -= LANE
    n_round = _round_up(N, tile_n)
    if n_round != N:
        x2 = jnp.pad(x2, ((0, 0), (0, n_round - N)))

    grid = (n_round // tile_n,)
    vmem_limit = int(min(max(fixed + per_col * tile_n + (8 << 20), 32 << 20), 48 << 20))

    kernel = functools.partial(_fourier_topk_kernel, k, F, f_pad)
    out2 = pl.pallas_call(
        kernel,
        out_shape=jax.ShapeDtypeStruct((S, n_round), jnp.float32),
        grid=grid,
        in_specs=[
            pl.BlockSpec((S, tile_n), lambda i: (0, i)),
            pl.BlockSpec((2 * f_pad, S), lambda i: (0, 0)),
            pl.BlockSpec((S, 2 * f_pad), lambda i: (0, 0)),
        ],
        out_specs=pl.BlockSpec((S, tile_n), lambda i: (0, i)),
        scratch_shapes=[pltpu.VMEM((2 * f_pad, tile_n), jnp.float32)],
        compiler_params=pltpu.CompilerParams(
            dimension_semantics=("parallel",),
            vmem_limit_bytes=vmem_limit,
        ),
    )(x2, fwd, inv)

    out = out2[:, :N].reshape(S, B, C).transpose(1, 0, 2)
    return out.astype(timeseries.dtype)


def _reference(x: np.ndarray, k: int) -> np.ndarray:
    """NumPy transliteration of the PyTorch forward."""
    B, S, C = x.shape
    ffts = np.fft.rfft(x, axis=1)
    mags = np.abs(ffts)
    filtered = np.zeros_like(ffts)
    for b in range(B):
        for c in range(C):
            idx = np.argsort(mags[b, :, c])[-k:]
            filtered[b, idx, c] = ffts[b, idx, c]
    return np.fft.irfft(filtered, S, axis=1)


if __name__ == "__main__":
    B, S, C = 2, 16, 4
    k = 3
    key = jax.random.PRNGKey(0)
    x = jax.random.normal(key, (B, S, C), dtype=jnp.float32)

    out = fourier_approximate(x, k)
    out = jax.block_until_ready(out)

    # NOTE: tie-breaking among exactly-equal magnitudes picks the lowest
    # frequency (reference picks argsort order); no ties with random data.
    ref = _reference(np.asarray(x, dtype=np.float64), k).astype(np.float32)
    np.testing.assert_allclose(np.asarray(out), ref, rtol=1e-4, atol=1e-4)

    print("KERNEL_OK")
</pallas_src>

<mosaic_0001>
module attributes {stable_mosaic.version = 11 : i64} {
  func.func @_fourier_topk_kernel(%arg0: i32, %arg1: memref<16x128xf32, #tpu.memory_space<vmem>>, %arg2: memref<32x16xf32, #tpu.memory_space<vmem>>, %arg3: memref<16x32xf32, #tpu.memory_space<vmem>>, %arg4: memref<16x128xf32, #tpu.memory_space<vmem>>, %arg5: memref<32x128xf32, #tpu.memory_space<vmem>>) attributes {dimension_semantics = [#tpu.dimension_semantics<parallel>], iteration_bounds = array<i64: 1>, scalar_prefetch = 0 : i64, scratch_operands = 1 : i64, tpu.core_type = #tpu.core_type<tc>, window_params = [{transform_indices = @transform_0, window_bounds = array<i64: 16, 128>}, {pipeline_mode = #tpu.pipeline_mode<synchronous>, transform_indices = @transform_1, window_bounds = array<i64: 32, 16>}, {pipeline_mode = #tpu.pipeline_mode<synchronous>, transform_indices = @transform_2, window_bounds = array<i64: 16, 32>}, {transform_indices = @transform_3, window_bounds = array<i64: 16, 128>}]} {
    %c0 = arith.constant 0 : index
    %c0_0 = arith.constant 0 : index
    %0 = vector.load %arg1[%c0, %c0_0] : memref<16x128xf32, #tpu.memory_space<vmem>>, vector<16x128xf32>
    %c0_1 = arith.constant 0 : index
    %c0_2 = arith.constant 0 : index
    %1 = vector.load %arg2[%c0_1, %c0_2] : memref<32x16xf32, #tpu.memory_space<vmem>>, vector<32x16xf32>
    %cst = arith.constant dense<0.000000e+00> : vector<32x128xf32>
    %2 = tpu.matmul %1, %0, %cst {dimension_numbers = #tpu.dot_dimension_numbers<[1], [0], [0], [1], [0, 0, 1, 1], [], []>} : vector<32x16xf32>, vector<16x128xf32>, vector<32x128xf32> -> vector<32x128xf32>
    %c0_3 = arith.constant 0 : index
    %c0_4 = arith.constant 0 : index
    %3 = vector.load %arg5[%c0_3, %c0_4] : memref<32x128xf32, #tpu.memory_space<vmem>>, vector<32x128xf32>
    tpu.vector_store %arg5[%c0_3, %c0_4], %2 {strides = array<i32>} : memref<32x128xf32, #tpu.memory_space<vmem>>, vector<32x128xf32>,
    %c0_5 = arith.constant 0 : index
    %c0_6 = arith.constant 0 : index
    %4 = vector.load %arg5[%c0_5, %c0_6] : memref<32x128xf32, #tpu.memory_space<vmem>>, vector<16x128xf32>
    %c16 = arith.constant 16 : index
    %c0_7 = arith.constant 0 : index
    %5 = vector.load %arg5[%c16, %c0_7] : memref<32x128xf32, #tpu.memory_space<vmem>>, vector<16x128xf32>
    %6 = arith.mulf %4, %4 : vector<16x128xf32>
    %7 = arith.mulf %5, %5 : vector<16x128xf32>
    %8 = arith.addf %6, %7 : vector<16x128xf32>
    %9 = tpu.iota {dimensions = array<i32: 0>} : vector<16x128xi32>
    %c9_i32 = arith.constant 9 : i32
    %10 = vector.broadcast %c9_i32 : i32 to vector<16x128xi32>
    %11 = arith.cmpi slt, %9, %10 : vector<16x128xi32>
    %cst_8 = arith.constant 0xFF800000 : f32
    %12 = vector.broadcast %cst_8 : f32 to vector<16x128xf32>
    %13 = arith.select %11, %8, %12 : vector<16x128xi1>, vector<16x128xf32>
    %cst_9 = arith.constant 0.000000e+00 : f32
    %14 = vector.broadcast %cst_9 : f32 to vector<16x128xf32>
    %c17_i32 = arith.constant 17 : i32
    %cst_10 = arith.constant 0xFF800000 : f32
    %c0_i32 = arith.constant 0 : i32
    %cst_11 = arith.constant dense<0xFF800000> : vector<128xf32>
    %15 = vector.multi_reduction <maximumf>, %13, %cst_11 [0] : vector<16x128xf32> to vector<128xf32>
    %16 = vector.shape_cast %15 : vector<128xf32> to vector<1x128xf32>
    %17 = vector.broadcast %16 : vector<1x128xf32> to vector<16x128xf32>
    %18 = arith.cmpf oeq, %13, %17 : vector<16x128xf32>
    %19 = vector.broadcast %c17_i32 : i32 to vector<16x128xi32>
    %20 = arith.select %18, %9, %19 : vector<16x128xi1>, vector<16x128xi32>
    %cst_12 = arith.constant dense<2147483647> : vector<128xi32>
    %21 = vector.multi_reduction <minsi>, %20, %cst_12 [0] : vector<16x128xi32> to vector<128xi32>
    %22 = vector.shape_cast %21 : vector<128xi32> to vector<1x128xi32>
    %23 = vector.broadcast %22 : vector<1x128xi32> to vector<16x128xi32>
    %24 = arith.cmpi eq, %9, %23 : vector<16x128xi32>
    %cst_13 = arith.constant 1.000000e+00 : f32
    %25 = vector.broadcast %cst_13 : f32 to vector<16x128xf32>
    %26 = arith.select %24, %25, %14 : vector<16x128xi1>, vector<16x128xf32>
    %27 = vector.broadcast %cst_10 : f32 to vector<16x128xf32>
    %28 = arith.select %24, %27, %13 : vector<16x128xi1>, vector<16x128xf32>
    %c1_i32 = arith.constant 1 : i32
    %cst_14 = arith.constant dense<0xFF800000> : vector<128xf32>
    %29 = vector.multi_reduction <maximumf>, %28, %cst_14 [0] : vector<16x128xf32> to vector<128xf32>
    %30 = vector.shape_cast %29 : vector<128xf32> to vector<1x128xf32>
    %31 = vector.broadcast %30 : vector<1x128xf32> to vector<16x128xf32>
    %32 = arith.cmpf oeq, %28, %31 : vector<16x128xf32>
    %33 = vector.broadcast %c17_i32 : i32 to vector<16x128xi32>
    %34 = arith.select %32, %9, %33 : vector<16x128xi1>, vector<16x128xi32>
    %cst_15 = arith.constant dense<2147483647> : vector<128xi32>
    %35 = vector.multi_reduction <minsi>, %34, %cst_15 [0] : vector<16x128xi32> to vector<128xi32>
    %36 = vector.shape_cast %35 : vector<128xi32> to vector<1x128xi32>
    %37 = vector.broadcast %36 : vector<1x128xi32> to vector<16x128xi32>
    %38 = arith.cmpi eq, %9, %37 : vector<16x128xi32>
    %cst_16 = arith.constant 1.000000e+00 : f32
    %39 = vector.broadcast %cst_16 : f32 to vector<16x128xf32>
    %40 = arith.select %38, %39, %26 : vector<16x128xi1>, vector<16x128xf32>
    %41 = vector.broadcast %cst_10 : f32 to vector<16x128xf32>
    %42 = arith.select %38, %41, %28 : vector<16x128xi1>, vector<16x128xf32>
    %c2_i32 = arith.constant 2 : i32
    %cst_17 = arith.constant dense<0xFF800000> : vector<128xf32>
    %43 = vector.multi_reduction <maximumf>, %42, %cst_17 [0] : vector<16x128xf32> to vector<128xf32>
    %44 = vector.shape_cast %43 : vector<128xf32> to vector<1x128xf32>
    %45 = vector.broadcast %44 : vector<1x128xf32> to vector<16x128xf32>
    %46 = arith.cmpf oeq, %42, %45 : vector<16x128xf32>
    %47 = vector.broadcast %c17_i32 : i32 to vector<16x128xi32>
    %48 = arith.select %46, %9, %47 : vector<16x128xi1>, vector<16x128xi32>
    %cst_18 = arith.constant dense<2147483647> : vector<128xi32>
    %49 = vector.multi_reduction <minsi>, %48, %cst_18 [0] : vector<16x128xi32> to vector<128xi32>
    %50 = vector.shape_cast %49 : vector<128xi32> to vector<1x128xi32>
    %51 = vector.broadcast %50 : vector<1x128xi32> to vector<16x128xi32>
    %52 = arith.cmpi eq, %9, %51 : vector<16x128xi32>
    %cst_19 = arith.constant 1.000000e+00 : f32
    %53 = vector.broadcast %cst_19 : f32 to vector<16x128xf32>
    %54 = arith.select %52, %53, %40 : vector<16x128xi1>, vector<16x128xf32>
    %55 = vector.broadcast %cst_10 : f32 to vector<16x128xf32>
    %56 = arith.select %52, %55, %42 : vector<16x128xi1>, vector<16x128xf32>
    %57 = arith.mulf %4, %54 : vector<16x128xf32>
    %c0_20 = arith.constant 0 : index
    %c0_21 = arith.constant 0 : index
    %58 = vector.load %arg5[%c0_20, %c0_21] : memref<32x128xf32, #tpu.memory_space<vmem>>, vector<16x128xf32>
    tpu.vector_store %arg5[%c0_20, %c0_21], %57 {strides = array<i32>} : memref<32x128xf32, #tpu.memory_space<vmem>>, vector<16x128xf32>,
    %59 = arith.mulf %5, %54 : vector<16x128xf32>
    %c16_22 = arith.constant 16 : index
    %c0_23 = arith.constant 0 : index
    %60 = vector.load %arg5[%c16_22, %c0_23] : memref<32x128xf32, #tpu.memory_space<vmem>>, vector<16x128xf32>
    tpu.vector_store %arg5[%c16_22, %c0_23], %59 {strides = array<i32>} : memref<32x128xf32, #tpu.memory_space<vmem>>, vector<16x128xf32>,
    %c0_24 = arith.constant 0 : index
    %c0_25 = arith.constant 0 : index
    %61 = vector.load %arg3[%c0_24, %c0_25] : memref<16x32xf32, #tpu.memory_space<vmem>>, vector<16x32xf32>
    %c0_26 = arith.constant 0 : index
    %c0_27 = arith.constant 0 : index
    %62 = vector.load %arg5[%c0_26, %c0_27] : memref<32x128xf32, #tpu.memory_space<vmem>>, vector<32x128xf32>
    %cst_28 = arith.constant dense<0.000000e+00> : vector<16x128xf32>
    %63 = tpu.matmul %61, %62, %cst_28 {dimension_numbers = #tpu.dot_dimension_numbers<[1], [0], [0], [1], [0, 0, 1, 1], [], []>} : vector<16x32xf32>, vector<32x128xf32>, vector<16x128xf32> -> vector<16x128xf32>
    %c0_29 = arith.constant 0 : index
    %c0_30 = arith.constant 0 : index
    %64 = vector.load %arg4[%c0_29, %c0_30] : memref<16x128xf32, #tpu.memory_space<vmem>>, vector<16x128xf32>
    tpu.vector_store %arg4[%c0_29, %c0_30], %63 {strides = array<i32>} : memref<16x128xf32, #tpu.memory_space<vmem>>, vector<16x128xf32>,
    return
  }
  func.func @transform_0(%arg0: i32) -> (i32, i32) {
    %c0_i32 = arith.constant 0 : i32
    %c0_i32_0 = arith.constant 0 : i32
    return %c0_i32, %arg0 : i32, i32
  }
  func.func @transform_1(%arg0: i32) -> (i32, i32) {
    %c0_i32 = arith.constant 0 : i32
    %c0_i32_0 = arith.constant 0 : i32
    %c0_i32_1 = arith.constant 0 : i32
    return %c0_i32, %c0_i32_0 : i32, i32
  }
  func.func @transform_2(%arg0: i32) -> (i32, i32) {
    %c0_i32 = arith.constant 0 : i32
    %c0_i32_0 = arith.constant 0 : i32
    %c0_i32_1 = arith.constant 0 : i32
    return %c0_i32, %c0_i32_0 : i32, i32
  }
  func.func @transform_3(%arg0: i32) -> (i32, i32) {
    %c0_i32 = arith.constant 0 : i32
    %c0_i32_0 = arith.constant 0 : i32
    return %c0_i32, %arg0 : i32, i32
  }
}

</mosaic_0001>

<llo_original>
// kernel: tpu_custom_call.1
$region0: #{tpu_custom_call.1}
  #allocation0 [shape = 'u32[]', space=smem, size = 0x4, offset = 0x4, fixed_abs, tag = 'smem constant byte address 0x4 - core index']
  #allocation1 [shape = 'u32[144,128]{1,0:T(1,128)}', space=vmem, size = 0x12000, scoped, tag = 'internal scratch']
  #allocation2 [shape = 'f32[32,128]{1,0:T(8,128)}', space=vmem, size = 0x4000, scoped, tag = 'scratch operand']
  %s0 = inlined_call_operand.vmem [shape: f32[16,128], index: 0, kind: input, shape index: {}]
  %s1 = inlined_call_operand.vmem [shape: f32[32,16], index: 1, kind: input, shape index: {}]
  %s2 = inlined_call_operand.vmem [shape: f32[16,32], index: 2, kind: input, shape index: {}]
  %s3 = inlined_call_operand.hbm [shape: f32[16,128], index: 3, kind: output, shape index: {}]
  %s4 = sld [smem:[#allocation0]]
  $region22: #{tpu_custom_call.1} parent=0
    _
  %s6 = ssub.s32 1, %s4
  %s7 = scalar_select 0, %s6, %s4
  $region1: #{tpu_custom_call.1} parent=0
    #allocation3 [shape = 'u8[8192]{0}', space=vmem, size = 0x2000, scoped, tag = 'output window, operand 0, single buffered']
    #allocation4 [shape = 's32[1]{0}', space=sflag, size = 0x4, scoped, tag = 'scoped memory for tpu_custom_call.1']
    %8 = vsyncpa [#allocation4], 0
    // Predicated region
    $region2: #{tpu_custom_call.1} parent=1 // pred_check
      _
    $region3: #{tpu_custom_call.1} parent=1 // pred_check_branch
      %10 = sbr.rel (0) target = $region5
    $region4: #{tpu_custom_call.1} parent=1 // pred_region
      _
    $region5: #{tpu_custom_call.1} parent=1 // pred_fallthru
      _
    // Predicated region
    $region6: #{tpu_custom_call.1} parent=1 // pred_check
      _
    $region7: #{tpu_custom_call.1} parent=1 // pred_check_branch
      %12 = sbr.rel (0) target = $region9
    $region8: #{tpu_custom_call.1} parent=1 // pred_region
      _
    $region9: #{tpu_custom_call.1} parent=1 // pred_fallthru
      _
    // Predicated region
    $region10: #{tpu_custom_call.1} parent=1 // pred_check
      _
    $region11: #{tpu_custom_call.1} parent=1 // pred_check_branch
      %14 = sbr.rel (0) target = $region13
    $region12: #{tpu_custom_call.1} parent=1 // pred_region
      _
    $region13: #{tpu_custom_call.1} parent=1 // pred_fallthru
      _
    %v15 = vld [vmem:[%s0] sm:$0xff]
    %v16 = vld [vmem:[%s0 + $0x8] sm:$0xff]
    %v17 = vld [vmem:[%s1] sm:$0xff]
    %v18 = vld [vmem:[%s1 + $0x8] sm:$0xff]
    %v19 = vld [vmem:[%s1 + $0x10] sm:$0xff]
    %v20 = vld [vmem:[%s1 + $0x18] sm:$0xff]
    %vm21 = vcmask 130048
    %v23 = vsel %vm21, %v17, 0
    %v26 = vsel %vm21, %v18, 0
    %v29 = vsel %vm21, %v19, 0
    %v32 = vsel %vm21, %v20, 0
    %34 = vmatprep.subr.mxu0 0.0
    %35 = vmatpush1.msra.mxu0 %v15
    %36 = vmatprep.subr.mxu0 0.0
    %37 = vmatpush1.msra.mxu0 %v16
    %38 = vmatprep.subr.mxu0 0.0
    %39 = vmatpush1.msra.mxu0 0.0
    %40 = vmatprep.subr.mxu0 0.0
    %41 = vmatpush1.msra.mxu0 0.0
    %42 = vmatprep.subr.mxu0 0.0
    %43 = vmatpush1.msra.mxu0 0.0
    %44 = vmatprep.subr.mxu0 0.0
    %45 = vmatpush1.msra.mxu0 0.0
    %46 = vmatprep.subr.mxu0 0.0
    %47 = vmatpush1.msra.mxu0 0.0
    %48 = vmatprep.subr.mxu0 0.0
    %49 = vmatpush1.msra.mxu0 0.0
    %50 = vmatprep.subr.mxu0 0.0
    %51 = vmatpush1.msra.mxu0 0.0
    %52 = vmatprep.subr.mxu0 0.0
    %53 = vmatpush1.msra.mxu0 0.0
    %54 = vmatprep.subr.mxu0 0.0
    %55 = vmatpush1.msra.mxu0 0.0
    %56 = vmatprep.subr.mxu0 0.0
    %57 = vmatpush1.msra.mxu0 0.0
    %58 = vmatprep.subr.mxu0 0.0
    %59 = vmatpush1.msra.mxu0 0.0
    %60 = vmatprep.subr.mxu0 0.0
    %61 = vmatpush1.msra.mxu0 0.0
    %62 = vmatprep.subr.mxu0 0.0
    %63 = vmatpush1.msra.mxu0 0.0
    %64 = vmatprep.subr.mxu0 0.0
    %65 = vmatpush1.msra.mxu0 0.0
    %66 = vmatprep.subr.mxu0 0.0
    %67 = vmatpush1.msra.mxu0 0.0
    %68 = vmatprep.subr.mxu0 0.0
    %69 = vmatpush1.msra.mxu0 0.0
    %70 = vmatprep.subr.mxu0 0.0
    %71 = vmatpush1.msra.mxu0 0.0
    %72 = vmatprep.subr.mxu0 0.0
    %73 = vmatpush1.msra.mxu0 0.0
    %74 = vmatprep.subr.mxu0 0.0
    %75 = vmatpush1.msra.mxu0 0.0
    %76 = vmatprep.subr.mxu0 0.0
    %77 = vmatpush1.msra.mxu0 0.0
    %78 = vmatprep.subr.mxu0 0.0
    %79 = vmatpush1.msra.mxu0 0.0
    %80 = vmatprep.subr.mxu0 0.0
    %81 = vmatpush1.msra.mxu0 0.0
    %82 = vmatprep.subr.mxu0 0.0
    %83 = vmatpush1.msra.mxu0 0.0
    %84 = vmatprep.subr.mxu0 0.0
    %85 = vmatpush1.msra.mxu0 0.0
    %86 = vmatprep.subr.mxu0 0.0
    %87 = vmatpush1.msra.mxu0 0.0
    %88 = vmatprep.subr.mxu0 0.0
    %89 = vmatpush1.msra.mxu0 0.0
    %90 = vmatprep.subr.mxu0 0.0
    %91 = vmatpush1.msra.mxu0 0.0
    %92 = vmatprep.subr.mxu0 0.0
    %93 = vmatpush1.msra.mxu0 0.0
    %94 = vmatprep.subr.mxu0 0.0
    %95 = vmatpush1.msra.mxu0 0.0
    %96 = vmatprep.subr.mxu0 0.0
    %97 = vmatpush1.msra.mxu0 0.0
    %98 = vmatprep.mubr.f32.mxu0 0.0
    %99 = vmatmul.mubr.f32.gmra.mrb[0].mxu0 %v23
    %v100 = vpop.f32.mrb[0].mxu0
    %v101 = vadd.f32 0.0, %v100
    %v102 = vpop.f32.mrb[0].mxu0
    %103 = vmatprep.mubr.f32.mxu0 0.0
    %104 = vmatmul.mubr.f32.gmra.mrb[0].mxu0 %v26
    %v105 = vpop.f32.mrb[0].mxu0
    %v106 = vadd.f32 0.0, %v105
    %v107 = vpop.f32.mrb[0].mxu0
    %108 = vmatprep.mubr.f32.mxu0 0.0
    %109 = vmatmul.mubr.f32.gmra.mrb[0].mxu0 %v29
    %v110 = vpop.f32.mrb[0].mxu0
    %v111 = vadd.f32 0.0, %v110
    %v112 = vpop.f32.mrb[0].mxu0
    %113 = vmatprep.mubr.f32.mxu0 0.0
    %114 = vmatmul.mubr.f32.gmra.mrb[0].mxu0 %v32
    %v115 = vpop.f32.mrb[0].mxu0
    %v116 = vadd.f32 0.0, %v115
    %v117 = vpop.f32.mrb[0].mxu0
    %118 = vdwg.mxu0
    %119 = vst [vmem:[#allocation2] sm:$0xff] %v101
    %120 = vst [vmem:[#allocation2 + $0x8] sm:$0xff] %v106
    %121 = vst [vmem:[#allocation2 + $0x10] sm:$0xff] %v111
    %122 = vst [vmem:[#allocation2 + $0x18] sm:$0xff] %v116
    %v123 = vld [vmem:[#allocation2] sm:$0xff]
    %v124 = vld [vmem:[#allocation2 + $0x8] sm:$0xff]
    %v125 = vld [vmem:[#allocation2 + $0x10] sm:$0xff]
    %v126 = vld [vmem:[#allocation2 + $0x18] sm:$0xff]
    %v127 = vmul.f32 %v123, %v123
    %v128 = vmul.f32 %v124, %v124
    %v129 = vmul.f32 %v125, %v125
    %v130 = vmul.f32 %v126, %v126
    %v131 = vadd.f32 %v127, %v129
    %v132 = vadd.f32 %v128, %v130
    %v133 = vlaneseq
    %v134 = vshrl.u32 %v133, 7
    %v135 = vadd.s32 %v134, 8
    %vm136 = vcmp.lt.s32.totalorder %v134, 9
    %vm137 = vcmp.lt.s32.totalorder %v135, 9
    %v138 = vsel %vm136, %v131, -inf
    %v139 = vsel %vm137, %v132, -inf
    %v140 = vmax.f32 %v138, %v139
    %v141 = vrot.slane %v140, 4
    %v142 = vmax.f32 %v140, %v141
    %v143 = vrot.slane %v142, 2
    %v144 = vmax.f32 %v142, %v143
    %v145 = vrot.slane %v144, 1
    %v146 = vmax.f32 %v144, %v145
    %vm147 = vcmp.eq.f32.partialorder %v138, %v146
    %vm148 = vcmp.eq.f32.partialorder %v139, %v146
    %v149 = vsel %vm147, %v134, 17
    %v150 = vsel %vm148, %v135, 17
    %vm151 = vcmp.lt.s32.totalorder %v149, %v150
    %v152 = vsel %vm151, %v149, %v150
    %v153 = vrot.slane %v152, 4
    %vm154 = vcmp.lt.s32.totalorder %v152, %v153
    %v155 = vsel %vm154, %v152, %v153
    %v156 = vrot.slane %v155, 2
    %vm157 = vcmp.lt.s32.totalorder %v155, %v156
    %v158 = vsel %vm157, %v155, %v156
    %v159 = vrot.slane %v158, 1
    %vm160 = vcmp.lt.s32.totalorder %v158, %v159
    %v161 = vsel %vm160, %v158, %v159
    %vm162 = vcmp.eq.s32.totalorder %v134, %v161
    %vm163 = vcmp.eq.s32.totalorder %v135, %v161
    %v164 = vsel %vm162, 1.0, 0.0
    %v165 = vsel %vm163, 1.0, 0.0
    %v166 = vsel %vm162, -inf, %v138
    %v167 = vsel %vm163, -inf, %v139
    %v168 = vmax.f32 %v166, %v167
    %v169 = vrot.slane %v168, 4
    %v170 = vmax.f32 %v168, %v169
    %v171 = vrot.slane %v170, 2
    %v172 = vmax.f32 %v170, %v171
    %v173 = vrot.slane %v172, 1
    %v174 = vmax.f32 %v172, %v173
    %vm175 = vcmp.eq.f32.partialorder %v166, %v174
    %vm176 = vcmp.eq.f32.partialorder %v167, %v174
    %v177 = vsel %vm175, %v134, 17
    %v178 = vsel %vm176, %v135, 17
    %vm179 = vcmp.lt.s32.totalorder %v177, %v178
    %v180 = vsel %vm179, %v177, %v178
    %v181 = vrot.slane %v180, 4
    %vm182 = vcmp.lt.s32.totalorder %v180, %v181
    %v183 = vsel %vm182, %v180, %v181
    %v184 = vrot.slane %v183, 2
    %vm185 = vcmp.lt.s32.totalorder %v183, %v184
    %v186 = vsel %vm185, %v183, %v184
    %v187 = vrot.slane %v186, 1
    %vm188 = vcmp.lt.s32.totalorder %v186, %v187
    %v189 = vsel %vm188, %v186, %v187
    %vm190 = vcmp.eq.s32.totalorder %v134, %v189
    %vm191 = vcmp.eq.s32.totalorder %v135, %v189
    %v192 = vsel %vm190, 1.0, %v164
    %v193 = vsel %vm191, 1.0, %v165
    %v194 = vsel %vm190, -inf, %v166
    %v195 = vsel %vm191, -inf, %v167
    %v196 = vmax.f32 %v194, %v195
    %v197 = vrot.slane %v196, 4
    %v198 = vmax.f32 %v196, %v197
    %v199 = vrot.slane %v198, 2
    %v200 = vmax.f32 %v198, %v199
    %v201 = vrot.slane %v200, 1
    %v202 = vmax.f32 %v200, %v201
    %vm203 = vcmp.eq.f32.partialorder %v194, %v202
    %vm204 = vcmp.eq.f32.partialorder %v195, %v202
    %v205 = vsel %vm203, %v134, 17
    %v206 = vsel %vm204, %v135, 17
    %vm207 = vcmp.lt.s32.totalorder %v205, %v206
    %v208 = vsel %vm207, %v205, %v206
    %v209 = vrot.slane %v208, 4
    %vm210 = vcmp.lt.s32.totalorder %v208, %v209
    %v211 = vsel %vm210, %v208, %v209
    %v212 = vrot.slane %v211, 2
    %vm213 = vcmp.lt.s32.totalorder %v211, %v212
    %v214 = vsel %vm213, %v211, %v212
    %v215 = vrot.slane %v214, 1
    %vm216 = vcmp.lt.s32.totalorder %v214, %v215
    %v217 = vsel %vm216, %v214, %v215
    %vm218 = vcmp.eq.s32.totalorder %v134, %v217
    %vm219 = vcmp.eq.s32.totalorder %v135, %v217
    %v220 = vsel %vm218, 1.0, %v192
    %v221 = vsel %vm219, 1.0, %v193
    %v222 = vmul.f32 %v123, %v220
    %v223 = vmul.f32 %v124, %v221
    %224 = vst [vmem:[#allocation2] sm:$0xff] %v222
    %225 = vst [vmem:[#allocation2 + $0x8] sm:$0xff] %v223
    %v226 = vmul.f32 %v125, %v220
    %v227 = vmul.f32 %v126, %v221
    %228 = vst [vmem:[#allocation2 + $0x10] sm:$0xff] %v226
    %229 = vst [vmem:[#allocation2 + $0x18] sm:$0xff] %v227
    %v230 = vld [vmem:[%s2] sm:$0xff]
    %v231 = vld [vmem:[%s2 + $0x8] sm:$0xff]
    %v232 = vld [vmem:[#allocation2] sm:$0xff]
    %v233 = vld [vmem:[#allocation2 + $0x8] sm:$0xff]
    %v234 = vld [vmem:[#allocation2 + $0x10] sm:$0xff]
    %v235 = vld [vmem:[#allocation2 + $0x18] sm:$0xff]
    %vm236 = vcmask 261120
    %v238 = vsel %vm236, %v230, 0
    %v241 = vsel %vm236, %v231, 0
    %243 = vmatprep.subr.mxu0 0.0
    %244 = vmatpush1.msra.mxu0 %v232
    %245 = vmatprep.subr.mxu0 0.0
    %246 = vmatpush1.msra.mxu0 %v233
    %247 = vmatprep.subr.mxu0 0.0
    %248 = vmatpush1.msra.mxu0 %v234
    %249 = vmatprep.subr.mxu0 0.0
    %250 = vmatpush1.msra.mxu0 %v235
    %251 = vmatprep.subr.mxu0 0.0
    %252 = vmatpush1.msra.mxu0 0.0
    %253 = vmatprep.subr.mxu0 0.0
    %254 = vmatpush1.msra.mxu0 0.0
    %255 = vmatprep.subr.mxu0 0.0
    %256 = vmatpush1.msra.mxu0 0.0
    %257 = vmatprep.subr.mxu0 0.0
    %258 = vmatpush1.msra.mxu0 0.0
    %259 = vmatprep.subr.mxu0 0.0
    %260 = vmatpush1.msra.mxu0 0.0
    %261 = vmatprep.subr.mxu0 0.0
    %262 = vmatpush1.msra.mxu0 0.0
    %263 = vmatprep.subr.mxu0 0.0
    %264 = vmatpush1.msra.mxu0 0.0
    %265 = vmatprep.subr.mxu0 0.0
    %266 = vmatpush1.msra.mxu0 0.0
    %267 = vmatprep.subr.mxu0 0.0
    %268 = vmatpush1.msra.mxu0 0.0
    %269 = vmatprep.subr.mxu0 0.0
    %270 = vmatpush1.msra.mxu0 0.0
    %271 = vmatprep.subr.mxu0 0.0
    %272 = vmatpush1.msra.mxu0 0.0
    %273 = vmatprep.subr.mxu0 0.0
    %274 = vmatpush1.msra.mxu0 0.0
    %275 = vmatprep.subr.mxu0 0.0
    %276 = vmatpush1.msra.mxu0 0.0
    %277 = vmatprep.subr.mxu0 0.0
    %278 = vmatpush1.msra.mxu0 0.0
    %279 = vmatprep.subr.mxu0 0.0
    %280 = vmatpush1.msra.mxu0 0.0
    %281 = vmatprep.subr.mxu0 0.0
    %282 = vmatpush1.msra.mxu0 0.0
    %283 = vmatprep.subr.mxu0 0.0
    %284 = vmatpush1.msra.mxu0 0.0
    %285 = vmatprep.subr.mxu0 0.0
    %286 = vmatpush1.msra.mxu0 0.0
    %287 = vmatprep.subr.mxu0 0.0
    %288 = vmatpush1.msra.mxu0 0.0
    %289 = vmatprep.subr.mxu0 0.0
    %290 = vmatpush1.msra.mxu0 0.0
    %291 = vmatprep.subr.mxu0 0.0
    %292 = vmatpush1.msra.mxu0 0.0
    %293 = vmatprep.subr.mxu0 0.0
    %294 = vmatpush1.msra.mxu0 0.0
    %295 = vmatprep.subr.mxu0 0.0
    %296 = vmatpush1.msra.mxu0 0.0
    %297 = vmatprep.subr.mxu0 0.0
    %298 = vmatpush1.msra.mxu0 0.0
    %299 = vmatprep.subr.mxu0 0.0
    %300 = vmatpush1.msra.mxu0 0.0
    %301 = vmatprep.subr.mxu0 0.0
    %302 = vmatpush1.msra.mxu0 0.0
    %303 = vmatprep.subr.mxu0 0.0
    %304 = vmatpush1.msra.mxu0 0.0
    %305 = vmatprep.subr.mxu0 0.0
    %306 = vmatpush1.msra.mxu0 0.0
    %307 = vmatprep.mubr.f32.mxu0 0.0
    %308 = vmatmul.mubr.f32.gmra.mrb[0].mxu0 %v238
    %v309 = vpop.f32.mrb[0].mxu0
    %v310 = vadd.f32 0.0, %v309
    %v311 = vpop.f32.mrb[0].mxu0
    %312 = vmatprep.mubr.f32.mxu0 0.0
    %313 = vmatmul.mubr.f32.gmra.mrb[0].mxu0 %v241
    %v314 = vpop.f32.mrb[0].mxu0
    %v315 = vadd.f32 0.0, %v314
    %v316 = vpop.f32.mrb[0].mxu0
    %317 = vdwg.mxu0
    %318 = vst [vmem:[#allocation3] sm:$0xff] %v310
    %319 = vst [vmem:[#allocation3 + $0x8] sm:$0xff] %v315
    // Predicated region
    $region14: #{tpu_custom_call.1} parent=1 // pred_check
      _
    $region15: #{tpu_custom_call.1} parent=1 // pred_check_branch
      %321 = sbr.rel (0) target = $region17
    $region16: #{tpu_custom_call.1} parent=1 // pred_region
      %s323 = ssub.s32 256, 256
      %324 = vsyncadd [#allocation4], %s323
      %s325 = sshll.u32 [#allocation3], 4
      %s326 = int_to_ptr.vmem [resolvable:$true] %s325
      %331 = dma.vmem_to_hbm [thread:$0]  %s326, 256, %s3, [#allocation4], 128, 128, 8
    $region17: #{tpu_custom_call.1} parent=1 // pred_fallthru
      _
    // Predicated region
    $region18: #{tpu_custom_call.1} parent=1 // pred_check
      _
    $region19: #{tpu_custom_call.1} parent=1 // pred_check_branch
      %333 = sbr.rel (0) target = $region21
    $region20: #{tpu_custom_call.1} parent=1 // pred_region
      %334 = dma.done [#allocation4], 256
    $region21: #{tpu_custom_call.1} parent=1 // pred_fallthru
      _
    %335 = vsyncpa [#allocation4], 1

</llo_original>
